<compile_context>
chip_gen: v7x
topology: tpu7x:2x2x1
jax: 0.10.0
libtpu: 0.0.40
codegen_flags: <defaults>
</compile_context>

<pallas_src>
import math

import jax
import jax.numpy as jnp
from jax.experimental import pallas as pl
from jax.experimental.pallas import tpu as pltpu


def _attention_kernel(x_ref, wqkv_ref, bqkv_ref, wo_ref, bo_ref,
                      out_ref, attn_ref):
    # Static shapes:
    #   x_ref    (B*S, D_in)  bf16      wqkv_ref (D_in, 3H) bf16
    #   bqkv_ref (1, 3H)      f32       wo_ref   (H, D_in)  bf16
    #   bo_ref   (1, D_in)    f32
    #   out_ref  (B*S, D_in)  f32       attn_ref (B, S, S)  f32
    B, S, _ = attn_ref.shape
    H = wo_ref.shape[0]
    scale = 1.0 / math.sqrt(H)

    # Fused QKV projection: one MXU matmul, f32 accumulation, f32 bias add.
    x = x_ref[...]                                                     # (B*S, D_in) bf16
    qkv = jnp.dot(x, wqkv_ref[...],
                  preferred_element_type=jnp.float32) + bqkv_ref[...]  # (B*S, 3H) f32

    # Split + unflatten batch.  S == 8 == sublane tile, so the reshape is a
    # pure relabeling of sublane tiles (no data movement).
    q = qkv[:, 0 * H:1 * H].reshape(B, S, H).astype(jnp.bfloat16)      # (B, S, H)
    k = qkv[:, 1 * H:2 * H].reshape(B, S, H).astype(jnp.bfloat16)      # (B, S, H)
    v = qkv[:, 2 * H:3 * H].reshape(B, S, H).astype(jnp.bfloat16)      # (B, S, H)

    # scores = Q @ K^T / sqrt(H): batched dot_general contracting the shared
    # feature axis directly (no explicit transpose / XLU round-trip).
    scores = jax.lax.dot_general(
        q, k, (((2,), (2,)), ((0,), (0,))),
        preferred_element_type=jnp.float32) * scale                    # (B, S, S) f32

    # Numerically-stable softmax, all in f32 (v5e-safe).
    m = jnp.max(scores, axis=-1, keepdims=True)
    e = jnp.exp(scores - m)
    denom = jnp.sum(e, axis=-1, keepdims=True)
    attn = e / denom                      # exact: attn is a module output
    attn_ref[...] = attn.astype(attn_ref.dtype)

    # attended = A @ V, batched over B.
    attended = jax.lax.dot_general(
        attn.astype(jnp.bfloat16), v, (((2,), (1,)), ((0,), (0,))),
        preferred_element_type=jnp.float32)                            # (B, S, H) f32

    # Output projection over the flattened batch: one MXU matmul.
    out = jnp.dot(attended.reshape(B * S, H).astype(jnp.bfloat16), wo_ref[...],
                  preferred_element_type=jnp.float32) + bo_ref[...]    # (B*S, D_in) f32
    out_ref[...] = out.astype(out_ref.dtype)


def attention_forward(x, params):
    """x: (B, S, D_in) float32.  params: dict of pre-transposed weights/biases."""
    B, S, D_in = x.shape
    H = params["wq"].shape[1]

    # Fuse QKV weights/biases (wrapper-side; constant-folded / fused under jit).
    wqkv = jnp.concatenate([params["wq"], params["wk"], params["wv"]], axis=1)  # (D_in, 3H)
    bqkv = jnp.concatenate([params["bq"], params["bk"], params["bv"]], axis=1)  # (1, 3H)

    # bf16 MXU operands -> half the HBM->VMEM bytes; accumulation stays f32.
    x_flat = x.reshape(B * S, D_in).astype(jnp.bfloat16)
    wqkv_bf = wqkv.astype(jnp.bfloat16)
    wo_bf = params["wo"].astype(jnp.bfloat16)
    bo = params["bo"]

    flops = 2 * B * S * (D_in * 3 * H + S * H + S * H + H * D_in)
    bytes_accessed = (x_flat.size * 2 + wqkv_bf.size * 2 + bqkv.size * 4
                      + wo_bf.size * 2 + bo.size * 4
                      + B * S * D_in * 4 + B * S * S * 4)

    vmem = lambda: pl.BlockSpec(memory_space=pltpu.MemorySpace.VMEM)

    out_flat, attn = pl.pallas_call(
        _attention_kernel,
        out_shape=(
            jax.ShapeDtypeStruct((B * S, D_in), jnp.float32),
            jax.ShapeDtypeStruct((B, S, S), jnp.float32),
        ),
        in_specs=[vmem() for _ in range(5)],
        out_specs=(vmem(), vmem()),
        cost_estimate=pl.CostEstimate(
            flops=int(flops),
            transcendentals=int(B * S * S),
            bytes_accessed=int(bytes_accessed)),
    )(x_flat, wqkv_bf, bqkv, wo_bf, bo)

    return out_flat.reshape(B, S, D_in), attn


def init_params(key, input_dim, hidden_dim):
    """Deterministic init mimicking nn.Linear's uniform(-1/sqrt(fan_in), +)."""
    def linear(k, fan_in, fan_out):
        kw, kb = jax.random.split(k)
        bound = 1.0 / math.sqrt(fan_in)
        # stored pre-transposed as (in, out); bias as (1, out)
        w = jax.random.uniform(kw, (fan_in, fan_out), jnp.float32, -bound, bound)
        b = jax.random.uniform(kb, (1, fan_out), jnp.float32, -bound, bound)
        return w, b

    kq, kk, kv, ko = jax.random.split(key, 4)
    wq, bq = linear(kq, input_dim, hidden_dim)
    wk, bk = linear(kk, input_dim, hidden_dim)
    wv, bv = linear(kv, input_dim, hidden_dim)
    wo, bo = linear(ko, hidden_dim, input_dim)
    return dict(wq=wq, bq=bq, wk=wk, bk=bk, wv=wv, bv=bv, wo=wo, bo=bo)


def attention_reference(x, p):
    """Pure-JAX f32 reference of the same forward pass."""
    q = x @ p["wq"] + p["bq"][0]
    k = x @ p["wk"] + p["bk"][0]
    v = x @ p["wv"] + p["bv"][0]
    scores = jnp.einsum("bsh,bth->bst", q, k) / math.sqrt(q.shape[-1])
    attn = jax.nn.softmax(scores, axis=-1)
    out = jnp.einsum("bst,bth->bsh", attn, v) @ p["wo"] + p["bo"][0]
    return out, attn


if __name__ == "__main__":
    key = jax.random.PRNGKey(0)
    k_par, k_x = jax.random.split(key)

    B, S, INPUT_DIM, HIDDEN_DIM = 2, 8, 32, 32
    params = init_params(k_par, INPUT_DIM, HIDDEN_DIM)
    x = jax.random.normal(k_x, (B, S, INPUT_DIM), jnp.float32)

    fwd = jax.jit(attention_forward)
    out, attn = fwd(x, params)
    out = jax.block_until_ready(out)
    attn = jax.block_until_ready(attn)

    # Sanity check against the pure-f32 JAX reference.  Tolerances are set for
    # bf16 MXU operands with f32 accumulation (mixed-precision forward pass).
    out_ref, attn_ref_ = attention_reference(x, params)
    assert out.shape == (B, S, INPUT_DIM) and attn.shape == (B, S, S)
    assert jnp.allclose(out, out_ref, atol=3e-2, rtol=3e-2)
    assert jnp.allclose(attn, attn_ref_, atol=1e-2, rtol=1e-2)
    # softmax rows still sum to 1 to f32 precision (exact divide kept)
    assert jnp.allclose(jnp.sum(attn, axis=-1), 1.0, atol=1e-5)

    print("KERNEL_OK")
</pallas_src>

<mosaic_0001>
module attributes {stable_mosaic.version = 11 : i64} {
  func.func @_attention_kernel(%arg0: memref<16x32xbf16, #tpu.memory_space<vmem>>, %arg1: memref<32x96xbf16, #tpu.memory_space<vmem>>, %arg2: memref<1x96xf32, #tpu.memory_space<vmem>>, %arg3: memref<32x32xbf16, #tpu.memory_space<vmem>>, %arg4: memref<1x32xf32, #tpu.memory_space<vmem>>, %arg5: memref<16x32xf32, #tpu.memory_space<vmem>>, %arg6: memref<2x8x8xf32, #tpu.memory_space<vmem>>) attributes {dimension_semantics = [], scalar_prefetch = 0 : i64, scratch_operands = 0 : i64, tpu.core_type = #tpu.core_type<tc>} {
    %c0 = arith.constant 0 : index
    %c0_0 = arith.constant 0 : index
    %0 = vector.load %arg0[%c0, %c0_0] : memref<16x32xbf16, #tpu.memory_space<vmem>>, vector<16x32xbf16>
    %c0_1 = arith.constant 0 : index
    %c0_2 = arith.constant 0 : index
    %1 = vector.load %arg1[%c0_1, %c0_2] : memref<32x96xbf16, #tpu.memory_space<vmem>>, vector<32x96xbf16>
    %cst = arith.constant dense<0.000000e+00> : vector<16x96xf32>
    %2 = tpu.matmul %0, %1, %cst {dimension_numbers = #tpu.dot_dimension_numbers<[1], [0], [0], [1], [0, 0, 1, 1], [], []>} : vector<16x32xbf16>, vector<32x96xbf16>, vector<16x96xf32> -> vector<16x96xf32>
    %c0_3 = arith.constant 0 : index
    %c0_4 = arith.constant 0 : index
    %3 = vector.load %arg2[%c0_3, %c0_4] : memref<1x96xf32, #tpu.memory_space<vmem>>, vector<1x96xf32>
    %4 = vector.broadcast %3 : vector<1x96xf32> to vector<16x96xf32>
    %5 = arith.addf %2, %4 : vector<16x96xf32>
    %6 = vector.extract_strided_slice %5 {offsets = [0, 0], sizes = [16, 32], strides = [1, 1]} : vector<16x96xf32> to vector<16x32xf32>
    %7 = vector.shape_cast %6 : vector<16x32xf32> to vector<2x8x32xf32>
    %8 = arith.truncf %7 : vector<2x8x32xf32> to vector<2x8x32xbf16>
    %9 = vector.extract_strided_slice %5 {offsets = [0, 32], sizes = [16, 32], strides = [1, 1]} : vector<16x96xf32> to vector<16x32xf32>
    %10 = vector.shape_cast %9 : vector<16x32xf32> to vector<2x8x32xf32>
    %11 = arith.truncf %10 : vector<2x8x32xf32> to vector<2x8x32xbf16>
    %12 = vector.extract_strided_slice %5 {offsets = [0, 64], sizes = [16, 32], strides = [1, 1]} : vector<16x96xf32> to vector<16x32xf32>
    %13 = vector.shape_cast %12 : vector<16x32xf32> to vector<2x8x32xf32>
    %14 = arith.truncf %13 : vector<2x8x32xf32> to vector<2x8x32xbf16>
    %cst_5 = arith.constant dense<0.000000e+00> : vector<2x8x8xf32>
    %15 = tpu.matmul %8, %11, %cst_5 {dimension_numbers = #tpu.dot_dimension_numbers<[2], [2], [1], [1], [0, 0, 0, 1, 1, 1], [0], [0]>} : vector<2x8x32xbf16>, vector<2x8x32xbf16>, vector<2x8x8xf32> -> vector<2x8x8xf32>
    %cst_6 = arith.constant 0.176776692 : f32
    %16 = vector.broadcast %cst_6 : f32 to vector<2x8x8xf32>
    %17 = arith.mulf %15, %16 : vector<2x8x8xf32>
    %cst_7 = arith.constant dense<0xFF800000> : vector<2x8xf32>
    %18 = vector.multi_reduction <maximumf>, %17, %cst_7 [2] : vector<2x8x8xf32> to vector<2x8xf32>
    %19 = vector.shape_cast %18 : vector<2x8xf32> to vector<2x8x1xf32>
    %20 = vector.broadcast %19 : vector<2x8x1xf32> to vector<2x8x8xf32>
    %21 = arith.subf %17, %20 : vector<2x8x8xf32>
    %22 = math.exp %21 : vector<2x8x8xf32>
    %cst_8 = arith.constant dense<0.000000e+00> : vector<2x8xf32>
    %23 = vector.multi_reduction <add>, %22, %cst_8 [2] : vector<2x8x8xf32> to vector<2x8xf32>
    %24 = vector.shape_cast %23 : vector<2x8xf32> to vector<2x8x1xf32>
    %25 = vector.broadcast %24 : vector<2x8x1xf32> to vector<2x8x8xf32>
    %26 = arith.divf %22, %25 : vector<2x8x8xf32>
    %c0_9 = arith.constant 0 : index
    %c0_10 = arith.constant 0 : index
    %c0_11 = arith.constant 0 : index
    %27 = vector.load %arg6[%c0_9, %c0_10, %c0_11] : memref<2x8x8xf32, #tpu.memory_space<vmem>>, vector<2x8x8xf32>
    tpu.vector_store %arg6[%c0_9, %c0_10, %c0_11], %26 {strides = array<i32>} : memref<2x8x8xf32, #tpu.memory_space<vmem>>, vector<2x8x8xf32>,
    %28 = arith.truncf %26 : vector<2x8x8xf32> to vector<2x8x8xbf16>
    %cst_12 = arith.constant dense<0.000000e+00> : vector<2x8x32xf32>
    %29 = tpu.matmul %28, %14, %cst_12 {dimension_numbers = #tpu.dot_dimension_numbers<[2], [1], [1], [2], [0, 0, 0, 1, 1, 2], [0], [0]>} : vector<2x8x8xbf16>, vector<2x8x32xbf16>, vector<2x8x32xf32> -> vector<2x8x32xf32>
    %30 = vector.shape_cast %29 : vector<2x8x32xf32> to vector<16x32xf32>
    %31 = arith.truncf %30 : vector<16x32xf32> to vector<16x32xbf16>
    %c0_13 = arith.constant 0 : index
    %c0_14 = arith.constant 0 : index
    %32 = vector.load %arg3[%c0_13, %c0_14] : memref<32x32xbf16, #tpu.memory_space<vmem>>, vector<32x32xbf16>
    %cst_15 = arith.constant dense<0.000000e+00> : vector<16x32xf32>
    %33 = tpu.matmul %31, %32, %cst_15 {dimension_numbers = #tpu.dot_dimension_numbers<[1], [0], [0], [1], [0, 0, 1, 1], [], []>} : vector<16x32xbf16>, vector<32x32xbf16>, vector<16x32xf32> -> vector<16x32xf32>
    %c0_16 = arith.constant 0 : index
    %c0_17 = arith.constant 0 : index
    %34 = vector.load %arg4[%c0_16, %c0_17] : memref<1x32xf32, #tpu.memory_space<vmem>>, vector<1x32xf32>
    %35 = vector.broadcast %34 : vector<1x32xf32> to vector<16x32xf32>
    %36 = arith.addf %33, %35 : vector<16x32xf32>
    %c0_18 = arith.constant 0 : index
    %c0_19 = arith.constant 0 : index
    %37 = vector.load %arg5[%c0_18, %c0_19] : memref<16x32xf32, #tpu.memory_space<vmem>>, vector<16x32xf32>
    tpu.vector_store %arg5[%c0_18, %c0_19], %36 {strides = array<i32>} : memref<16x32xf32, #tpu.memory_space<vmem>>, vector<16x32xf32>,
    return
  }
}

</mosaic_0001>

<llo_original>
// kernel: attention_forward.1
$region0: #{attention_forward.1}
  #allocation0 [shape = 'u32[]', space=smem, size = 0x4, offset = 0x4, fixed_abs, tag = 'smem constant byte address 0x4 - core index']
  #allocation1 [shape = 'u32[144,128]{1,0:T(1,128)}', space=vmem, size = 0x12000, scoped, tag = 'internal scratch']
  %s0 = inlined_call_operand.vmem [shape: bf16[16,32], index: 0, kind: input, shape index: {}]
  %s1 = inlined_call_operand.vmem [shape: bf16[32,96], index: 1, kind: input, shape index: {}]
  %s2 = inlined_call_operand.vmem [shape: f32[1,96], index: 2, kind: input, shape index: {}]
  %s3 = inlined_call_operand.vmem [shape: bf16[32,32], index: 3, kind: input, shape index: {}]
  %s4 = inlined_call_operand.vmem [shape: f32[1,32], index: 4, kind: input, shape index: {}]
  %s5 = inlined_call_operand.hbm [shape: f32[16,32], index: 5, kind: output, shape index: {0}]
  %s6 = inlined_call_operand.hbm [shape: f32[2,8,8], index: 6, kind: output, shape index: {1}]
  %7 = xla_tuple %s5, %s6
  %s8 = sld [smem:[#allocation0]]
  $region38: #{attention_forward.1} parent=0
    _
  %s10 = ssub.s32 1, %s8
  %s11 = scalar_select 0, %s10, %s8
  $region1: #{attention_forward.1} parent=0
    #allocation2 [shape = 'u8[8192]{0}', space=vmem, size = 0x2000, scoped, tag = 'output window, operand 0, single buffered']
    #allocation3 [shape = 's32[1]{0}', space=sflag, size = 0x4, scoped, tag = 'scoped memory for attention_forward.1']
    #allocation4 [shape = 'u8[8192]{0}', space=vmem, size = 0x2000, scoped, tag = 'output window, operand 1, single buffered']
    #allocation5 [shape = 's32[1]{0}', space=sflag, size = 0x4, scoped, tag = 'scoped memory for attention_forward.1']
    %12 = vsyncpa [#allocation3], 0
    %13 = vsyncpa [#allocation5], 0
    // Predicated region
    $region2: #{attention_forward.1} parent=1 // pred_check
      _
    $region3: #{attention_forward.1} parent=1 // pred_check_branch
      %15 = sbr.rel (0) target = $region5
    $region4: #{attention_forward.1} parent=1 // pred_region
      _
    $region5: #{attention_forward.1} parent=1 // pred_fallthru
      _
    // Predicated region
    $region6: #{attention_forward.1} parent=1 // pred_check
      _
    $region7: #{attention_forward.1} parent=1 // pred_check_branch
      %17 = sbr.rel (0) target = $region9
    $region8: #{attention_forward.1} parent=1 // pred_region
      _
    $region9: #{attention_forward.1} parent=1 // pred_fallthru
      _
    // Predicated region
    $region10: #{attention_forward.1} parent=1 // pred_check
      _
    $region11: #{attention_forward.1} parent=1 // pred_check_branch
      %19 = sbr.rel (0) target = $region13
    $region12: #{attention_forward.1} parent=1 // pred_region
      _
    $region13: #{attention_forward.1} parent=1 // pred_fallthru
      _
    // Predicated region
    $region14: #{attention_forward.1} parent=1 // pred_check
      _
    $region15: #{attention_forward.1} parent=1 // pred_check_branch
      %21 = sbr.rel (0) target = $region17
    $region16: #{attention_forward.1} parent=1 // pred_region
      _
    $region17: #{attention_forward.1} parent=1 // pred_fallthru
      _
    // Predicated region
    $region18: #{attention_forward.1} parent=1 // pred_check
      _
    $region19: #{attention_forward.1} parent=1 // pred_check_branch
      %23 = sbr.rel (0) target = $region21
    $region20: #{attention_forward.1} parent=1 // pred_region
      _
    $region21: #{attention_forward.1} parent=1 // pred_fallthru
      _
    %v25 = vld [vmem:[%s0] sm:$0xf]
    %v26 = vld [vmem:[%s0 + $0x4] sm:$0xf]
    %v27 = vld [vmem:[%s1] sm:$0xf]
    %v28 = vld [vmem:[%s1 + $0x4] sm:$0xf]
    %v29 = vld [vmem:[%s1 + $0x8] sm:$0xf]
    %v30 = vld [vmem:[%s1 + $0xc] sm:$0xf]
    %v31 = vld [vmem:[%s2] sm:$0x1]
    %v33 = vlaneseq
    %v34 = vshrl.u32 %v33, 7
    %v35 = vsub.s32 0, %v34
    %v36 = vrot.slane %v31, %v35
    %v40 = vunpack.c.l.b16 %v25
    %v41 = vunpack.c.l.b16 %v26
    %v42 = vpack.c.b16 %v41, %v40
    %v47 = vunpack.c.l.b16 %v27
    %v48 = vunpack.c.l.b16 %v28
    %v49 = vunpack.c.l.b16 %v29
    %v50 = vunpack.c.l.b16 %v30
    %v51 = vpack.c.b16 %v48, %v47
    %v52 = vpack.c.b16 %v50, %v49
    %vm55 = vcmask 261120
    %v57 = vsel %vm55, %v42, 0
    %59 = vmatprep.subr.bf16.mxu0 0
    %60 = vmatpush1.bf16.msra.mxu0 %v51
    %61 = vmatprep.subr.bf16.mxu0 0
    %62 = vmatpush1.bf16.msra.mxu0 %v52
    %63 = vmatprep.subr.bf16.mxu0 0
    %64 = vmatpush1.bf16.msra.mxu0 0
    %65 = vmatprep.subr.bf16.mxu0 0
    %66 = vmatpush1.bf16.msra.mxu0 0
    %67 = vmatprep.subr.bf16.mxu0 0
    %68 = vmatpush1.bf16.msra.mxu0 0
    %69 = vmatprep.subr.bf16.mxu0 0
    %70 = vmatpush1.bf16.msra.mxu0 0
    %71 = vmatprep.subr.bf16.mxu0 0
    %72 = vmatpush1.bf16.msra.mxu0 0
    %73 = vmatprep.subr.bf16.mxu0 0
    %74 = vmatpush1.bf16.msra.mxu0 0
    %75 = vmatprep.subr.bf16.mxu0 0
    %76 = vmatpush1.bf16.msra.mxu0 0
    %77 = vmatprep.subr.bf16.mxu0 0
    %78 = vmatpush1.bf16.msra.mxu0 0
    %79 = vmatprep.subr.bf16.mxu0 0
    %80 = vmatpush1.bf16.msra.mxu0 0
    %81 = vmatprep.subr.bf16.mxu0 0
    %82 = vmatpush1.bf16.msra.mxu0 0
    %83 = vmatprep.subr.bf16.mxu0 0
    %84 = vmatpush1.bf16.msra.mxu0 0
    %85 = vmatprep.subr.bf16.mxu0 0
    %86 = vmatpush1.bf16.msra.mxu0 0
    %87 = vmatprep.subr.bf16.mxu0 0
    %88 = vmatpush1.bf16.msra.mxu0 0
    %89 = vmatprep.subr.bf16.mxu0 0
    %90 = vmatpush1.bf16.msra.mxu0 0
    %91 = vmatprep.mubr.bf16.mxu0 0
    %92 = vmatmul.mubr.bf16.gmra.mrb[0].mxu0 %v57
    %v93 = vpop.f32.mrb[0].mxu0
    %v94 = vadd.f32 %v36, %v93
    %v95 = vpop.f32.mrb[0].mxu0
    %v96 = vpop.f32.mrb[0].mxu0
    %v97 = vadd.f32 %v36, %v96
    %v98 = vpop.f32.mrb[0].mxu0
    %99 = vdwg.mxu0
    %v100 = vpack.c.bf16 %v94, %v94
    %v101 = vpack.c.bf16 %v97, %v97
    %103 = vrot.lane.b32.xlu0 %v100, 96
    %v104 = vpop.permute.xlu0 %103
    %v106 = vsel %vm55, %v100, 0
    %v109 = vsel %vm55, %v104, 0
    %111 = vmatprep.subr.bf16.mxu0 0
    %112 = vmatpush1.bf16.xpose.msra.mxu0 %v109
    %113 = vmatprep.subr.bf16.mxu0 0
    %114 = vmatpush1.bf16.xpose.msra.mxu0 0
    %115 = vmatprep.subr.bf16.mxu0 0
    %116 = vmatpush1.bf16.xpose.msra.mxu0 0
    %117 = vmatprep.subr.bf16.mxu0 0
    %118 = vmatpush1.bf16.xpose.msra.mxu0 0
    %119 = vmatprep.subr.bf16.mxu0 0
    %120 = vmatpush1.bf16.xpose.msra.mxu0 0
    %121 = vmatprep.subr.bf16.mxu0 0
    %122 = vmatpush1.bf16.xpose.msra.mxu0 0
    %123 = vmatprep.subr.bf16.mxu0 0
    %124 = vmatpush1.bf16.xpose.msra.mxu0 0
    %125 = vmatprep.subr.bf16.mxu0 0
    %126 = vmatpush1.bf16.xpose.msra.mxu0 0
    %127 = vmatprep.subr.bf16.mxu0 0
    %128 = vmatpush1.bf16.xpose.msra.mxu0 0
    %129 = vmatprep.subr.bf16.mxu0 0
    %130 = vmatpush1.bf16.xpose.msra.mxu0 0
    %131 = vmatprep.subr.bf16.mxu0 0
    %132 = vmatpush1.bf16.xpose.msra.mxu0 0
    %133 = vmatprep.subr.bf16.mxu0 0
    %134 = vmatpush1.bf16.xpose.msra.mxu0 0
    %135 = vmatprep.subr.bf16.mxu0 0
    %136 = vmatpush1.bf16.xpose.msra.mxu0 0
    %137 = vmatprep.subr.bf16.mxu0 0
    %138 = vmatpush1.bf16.xpose.msra.mxu0 0
    %139 = vmatprep.subr.bf16.mxu0 0
    %140 = vmatpush1.bf16.xpose.msra.mxu0 0
    %141 = vmatprep.subr.bf16.mxu0 0
    %142 = vmatpush1.bf16.xpose.msra.mxu0 0
    %143 = vmatprep.mubr.bf16.mxu0 0
    %144 = vmatmul.mubr.bf16.gmra.mrb[0].mxu0 %v106
    %v145 = vpop.f32.mrb[0].mxu0
    %v146 = vadd.f32 0.0, %v145
    %v147 = vpop.f32.mrb[0].mxu0
    %v148 = vpop.f32.mrb[0].mxu0
    %v149 = vpop.f32.mrb[0].mxu0
    %150 = vdwg.mxu0
    %152 = vrot.lane.b32.xlu0 %v101, 96
    %v153 = vpop.permute.xlu0 %152
    %v155 = vsel %vm55, %v101, 0
    %v158 = vsel %vm55, %v153, 0
    %160 = vmatprep.subr.bf16.mxu0 0
    %161 = vmatpush1.bf16.xpose.msra.mxu0 %v158
    %162 = vmatprep.subr.bf16.mxu0 0
    %163 = vmatpush1.bf16.xpose.msra.mxu0 0
    %164 = vmatprep.subr.bf16.mxu0 0
    %165 = vmatpush1.bf16.xpose.msra.mxu0 0
    %166 = vmatprep.subr.bf16.mxu0 0
    %167 = vmatpush1.bf16.xpose.msra.mxu0 0
    %168 = vmatprep.subr.bf16.mxu0 0
    %169 = vmatpush1.bf16.xpose.msra.mxu0 0
    %170 = vmatprep.subr.bf16.mxu0 0
    %171 = vmatpush1.bf16.xpose.msra.mxu0 0
    %172 = vmatprep.subr.bf16.mxu0 0
    %173 = vmatpush1.bf16.xpose.msra.mxu0 0
    %174 = vmatprep.subr.bf16.mxu0 0
    %175 = vmatpush1.bf16.xpose.msra.mxu0 0
    %176 = vmatprep.subr.bf16.mxu0 0
    %177 = vmatpush1.bf16.xpose.msra.mxu0 0
    %178 = vmatprep.subr.bf16.mxu0 0
    %179 = vmatpush1.bf16.xpose.msra.mxu0 0
    %180 = vmatprep.subr.bf16.mxu0 0
    %181 = vmatpush1.bf16.xpose.msra.mxu0 0
    %182 = vmatprep.subr.bf16.mxu0 0
    %183 = vmatpush1.bf16.xpose.msra.mxu0 0
    %184 = vmatprep.subr.bf16.mxu0 0
    %185 = vmatpush1.bf16.xpose.msra.mxu0 0
    %186 = vmatprep.subr.bf16.mxu0 0
    %187 = vmatpush1.bf16.xpose.msra.mxu0 0
    %188 = vmatprep.subr.bf16.mxu0 0
    %189 = vmatpush1.bf16.xpose.msra.mxu0 0
    %190 = vmatprep.subr.bf16.mxu0 0
    %191 = vmatpush1.bf16.xpose.msra.mxu0 0
    %192 = vmatprep.mubr.bf16.mxu0 0
    %193 = vmatmul.mubr.bf16.gmra.mrb[0].mxu0 %v155
    %v194 = vpop.f32.mrb[0].mxu0
    %v195 = vadd.f32 0.0, %v194
    %v196 = vpop.f32.mrb[0].mxu0
    %v197 = vpop.f32.mrb[0].mxu0
    %v198 = vpop.f32.mrb[0].mxu0
    %199 = vdwg.mxu0
    %v200 = vmul.f32 %v146, 0.17677669
    %v201 = vmul.f32 %v195, 0.17677669
    %vm202 = vcmask 64512
    %v203 = vsel %vm202, %v200, -inf
    %204 = vmax.xlane.f32.xlu0 %v203
    %v205 = vpop.xlane.xlu0 %204
    %v206 = vsel %vm202, %v201, -inf
    %207 = vmax.xlane.f32.xlu0 %v206
    %v208 = vpop.xlane.xlu0 %207
    %v209 = vsub.f32 %v200, %v205
    %v210 = vsub.f32 %v201, %v208
    %v211 = vmul.f32 %v209, 1.442695
    %v212 = vpow.pop %v211
    %v213 = vmul.f32 %v210, 1.442695
    %v214 = vpow.pop %v213
    %v215 = vsel %vm202, %v212, 0.0
    %216 = vadd.xlane.f32.xlu0 %v215
    %v217 = vpop.xlane.xlu0 %216
    %v218 = vsel %vm202, %v214, 0.0
    %219 = vadd.xlane.f32.xlu0 %v218
    %v220 = vpop.xlane.xlu0 %219
    %v221 = vrcp.pop %v217
    %v222 = vmul.f32 %v212, %v221
    %v223 = vrcp.pop %v220
    %v224 = vmul.f32 %v214, %v223
    %225 = vst.msk [vmem:[#allocation4] sm:$0xff] %vm202, %v222
    %226 = vst.msk [vmem:[#allocation4 + $0x8] sm:$0xff] %vm202, %v224
    %v227 = vpack.c.bf16 %v222, %v222
    %v228 = vpack.c.bf16 %v224, %v224
    %229 = vrot.lane.b32.xlu0 %v100, 64
    %v230 = vpop.permute.xlu0 %229
    %v232 = vsel %vm202, %v227, 0
    %vm234 = vcmask 1043456
    %v236 = vsel %vm234, %v230, 0
    %238 = vmatprep.subr.bf16.mxu0 0
    %239 = vmatpush1.bf16.msra.mxu0 %v236
    %240 = vmatprep.subr.bf16.mxu0 0
    %241 = vmatpush1.bf16.msra.mxu0 0
    %242 = vmatprep.subr.bf16.mxu0 0
    %243 = vmatpush1.bf16.msra.mxu0 0
    %244 = vmatprep.subr.bf16.mxu0 0
    %245 = vmatpush1.bf16.msra.mxu0 0
    %246 = vmatprep.subr.bf16.mxu0 0
    %247 = vmatpush1.bf16.msra.mxu0 0
    %248 = vmatprep.subr.bf16.mxu0 0
    %249 = vmatpush1.bf16.msra.mxu0 0
    %250 = vmatprep.subr.bf16.mxu0 0
    %251 = vmatpush1.bf16.msra.mxu0 0
    %252 = vmatprep.subr.bf16.mxu0 0
    %253 = vmatpush1.bf16.msra.mxu0 0
    %254 = vmatprep.subr.bf16.mxu0 0
    %255 = vmatpush1.bf16.msra.mxu0 0
    %256 = vmatprep.subr.bf16.mxu0 0
    %257 = vmatpush1.bf16.msra.mxu0 0
    %258 = vmatprep.subr.bf16.mxu0 0
    %259 = vmatpush1.bf16.msra.mxu0 0
    %260 = vmatprep.subr.bf16.mxu0 0
    %261 = vmatpush1.bf16.msra.mxu0 0
    %262 = vmatprep.subr.bf16.mxu0 0
    %263 = vmatpush1.bf16.msra.mxu0 0
    %264 = vmatprep.subr.bf16.mxu0 0
    %265 = vmatpush1.bf16.msra.mxu0 0
    %266 = vmatprep.subr.bf16.mxu0 0
    %267 = vmatpush1.bf16.msra.mxu0 0
    %268 = vmatprep.subr.bf16.mxu0 0
    %269 = vmatpush1.bf16.msra.mxu0 0
    %270 = vmatprep.mubr.bf16.mxu0 0
    %271 = vmatmul.mubr.bf16.gmra.mrb[0].mxu0 %v232
    %v272 = vpop.f32.mrb[0].mxu0
    %v273 = vadd.f32 0.0, %v272
    %v274 = vpop.f32.mrb[0].mxu0
    %v275 = vpop.f32.mrb[0].mxu0
    %v276 = vpop.f32.mrb[0].mxu0
    %277 = vdwg.mxu0
    %278 = vrot.lane.b32.xlu0 %v101, 64
    %v279 = vpop.permute.xlu0 %278
    %v281 = vsel %vm202, %v228, 0
    %v284 = vsel %vm234, %v279, 0
    %286 = vmatprep.subr.bf16.mxu0 0
    %287 = vmatpush1.bf16.msra.mxu0 %v284
    %288 = vmatprep.subr.bf16.mxu0 0
    %289 = vmatpush1.bf16.msra.mxu0 0
    %290 = vmatprep.subr.bf16.mxu0 0
    %291 = vmatpush1.bf16.msra.mxu0 0
    %292 = vmatprep.subr.bf16.mxu0 0
    %293 = vmatpush1.bf16.msra.mxu0 0
    %294 = vmatprep.subr.bf16.mxu0 0
    %295 = vmatpush1.bf16.msra.mxu0 0
    %296 = vmatprep.subr.bf16.mxu0 0
    %297 = vmatpush1.bf16.msra.mxu0 0
    %298 = vmatprep.subr.bf16.mxu0 0
    %299 = vmatpush1.bf16.msra.mxu0 0
    %300 = vmatprep.subr.bf16.mxu0 0
    %301 = vmatpush1.bf16.msra.mxu0 0
    %302 = vmatprep.subr.bf16.mxu0 0
    %303 = vmatpush1.bf16.msra.mxu0 0
    %304 = vmatprep.subr.bf16.mxu0 0
    %305 = vmatpush1.bf16.msra.mxu0 0
    %306 = vmatprep.subr.bf16.mxu0 0
    %307 = vmatpush1.bf16.msra.mxu0 0
    %308 = vmatprep.subr.bf16.mxu0 0
    %309 = vmatpush1.bf16.msra.mxu0 0
    %310 = vmatprep.subr.bf16.mxu0 0
    %311 = vmatpush1.bf16.msra.mxu0 0
    %312 = vmatprep.subr.bf16.mxu0 0
    %313 = vmatpush1.bf16.msra.mxu0 0
    %314 = vmatprep.subr.bf16.mxu0 0
    %315 = vmatpush1.bf16.msra.mxu0 0
    %316 = vmatprep.subr.bf16.mxu0 0
    %317 = vmatpush1.bf16.msra.mxu0 0
    %318 = vmatprep.mubr.bf16.mxu0 0
    %319 = vmatmul.mubr.bf16.gmra.mrb[0].mxu0 %v281
    %v320 = vpop.f32.mrb[0].mxu0
    %v321 = vadd.f32 0.0, %v320
    %v322 = vpop.f32.mrb[0].mxu0
    %v323 = vpop.f32.mrb[0].mxu0
    %v324 = vpop.f32.mrb[0].mxu0
    %325 = vdwg.mxu0
    %v326 = vpack.c.bf16 %v321, %v273
    %v327 = vld [vmem:[%s3] sm:$0xf]
    %v328 = vld [vmem:[%s3 + $0x4] sm:$0xf]
    %v329 = vld [vmem:[%s3 + $0x8] sm:$0xf]
    %v330 = vld [vmem:[%s3 + $0xc] sm:$0xf]
    %v331 = vld [vmem:[%s4] sm:$0x1]
    %v333 = vlaneseq
    %v334 = vshrl.u32 %v333, 7
    %v335 = vsub.s32 0, %v334
    %v336 = vrot.slane %v331, %v335
    %v342 = vunpack.c.l.b16 %v327
    %v343 = vunpack.c.l.b16 %v328
    %v344 = vunpack.c.l.b16 %v329
    %v345 = vunpack.c.l.b16 %v330
    %v346 = vpack.c.b16 %v343, %v342
    %v347 = vpack.c.b16 %v345, %v344
    %v351 = vsel %vm55, %v326, 0
    %353 = vmatprep.subr.bf16.mxu0 0
    %354 = vmatpush1.bf16.msra.mxu0 %v346
    %355 = vmatprep.subr.bf16.mxu0 0
    %356 = vmatpush1.bf16.msra.mxu0 %v347
    %357 = vmatprep.subr.bf16.mxu0 0
    %358 = vmatpush1.bf16.msra.mxu0 0
    %359 = vmatprep.subr.bf16.mxu0 0
    %360 = vmatpush1.bf16.msra.mxu0 0
    %361 = vmatprep.subr.bf16.mxu0 0
    %362 = vmatpush1.bf16.msra.mxu0 0
    %363 = vmatprep.subr.bf16.mxu0 0
    %364 = vmatpush1.bf16.msra.mxu0 0
    %365 = vmatprep.subr.bf16.mxu0 0
    %366 = vmatpush1.bf16.msra.mxu0 0
    %367 = vmatprep.subr.bf16.mxu0 0
    %368 = vmatpush1.bf16.msra.mxu0 0
    %369 = vmatprep.subr.bf16.mxu0 0
    %370 = vmatpush1.bf16.msra.mxu0 0
    %371 = vmatprep.subr.bf16.mxu0 0
    %372 = vmatpush1.bf16.msra.mxu0 0
    %373 = vmatprep.subr.bf16.mxu0 0
    %374 = vmatpush1.bf16.msra.mxu0 0
    %375 = vmatprep.subr.bf16.mxu0 0
    %376 = vmatpush1.bf16.msra.mxu0 0
    %377 = vmatprep.subr.bf16.mxu0 0
    %378 = vmatpush1.bf16.msra.mxu0 0
    %379 = vmatprep.subr.bf16.mxu0 0
    %380 = vmatpush1.bf16.msra.mxu0 0
    %381 = vmatprep.subr.bf16.mxu0 0
    %382 = vmatpush1.bf16.msra.mxu0 0
    %383 = vmatprep.subr.bf16.mxu0 0
    %384 = vmatpush1.bf16.msra.mxu0 0
    %385 = vmatprep.mubr.bf16.mxu0 0
    %386 = vmatmul.mubr.bf16.gmra.mrb[0].mxu0 %v351
    %v387 = vpop.f32.mrb[0].mxu0
    %v388 = vadd.f32 %v336, %v387
    %v389 = vpop.f32.mrb[0].mxu0
    %v390 = vpop.f32.mrb[0].mxu0
    %v391 = vadd.f32 %v336, %v390
    %v392 = vpop.f32.mrb[0].mxu0
    %393 = vdwg.mxu0
    %394 = vst.msk [vmem:[#allocation2] sm:$0xff] %vm55, %v388
    %395 = vst.msk [vmem:[#allocation2 + $0x8] sm:$0xff] %vm55, %v391
    // Predicated region
    $region22: #{attention_forward.1} parent=1 // pred_check
      _
    $region23: #{attention_forward.1} parent=1 // pred_check_branch
      %397 = sbr.rel (0) target = $region25
    $region24: #{attention_forward.1} parent=1 // pred_region
      %s399 = ssub.s32 256, 256
      %400 = vsyncadd [#allocation3], %s399
      %s401 = sshll.u32 [#allocation2], 4
      %s402 = int_to_ptr.vmem [resolvable:$true] %s401
      %407 = dma.vmem_to_hbm [thread:$0]  %s402, 256, %s5, [#allocation3], 128, 128, 8
    $region25: #{attention_forward.1} parent=1 // pred_fallthru
      _
    // Predicated region
    $region26: #{attention_forward.1} parent=1 // pred_check
      _
    $region27: #{attention_forward.1} parent=1 // pred_check_branch
      %409 = sbr.rel (0) target = $region29
    $region28: #{attention_forward.1} parent=1 // pred_region
      %s411 = ssub.s32 256, 256
      %412 = vsyncadd [#allocation5], %s411
      %s413 = sshll.u32 [#allocation4], 4
      %s414 = int_to_ptr.vmem [resolvable:$true] %s413
      %419 = dma.vmem_to_hbm [thread:$0]  %s414, 256, %s6, [#allocation5], 128, 128, 8
    $region29: #{attention_forward.1} parent=1 // pred_fallthru
      _
    // Predicated region
    $region30: #{attention_forward.1} parent=1 // pred_check
      _
    $region31: #{attention_forward.1} parent=1 // pred_check_branch
      %421 = sbr.rel (0) target = $region33
    $region32: #{attention_forward.1} parent=1 // pred_region
      %422 = dma.done [#allocation3], 256
    $region33: #{attention_forward.1} parent=1 // pred_fallthru
      _
    // Predicated region
    $region34: #{attention_forward.1} parent=1 // pred_check
      _
    $region35: #{attention_forward.1} parent=1 // pred_check_branch
      %424 = sbr.rel (0) target = $region37
    $region36: #{attention_forward.1} parent=1 // pred_region
      %425 = dma.done [#allocation5], 256
    $region37: #{attention_forward.1} parent=1 // pred_fallthru
      _
    %426 = vsyncpa [#allocation3], 1
    %427 = vsyncpa [#allocation5], 1

</llo_original>
